<compile_context>
chip_gen: v7x
topology: tpu7x:2x2x1
jax: 0.10.0
libtpu: 0.0.40
codegen_flags: <defaults>
</compile_context>

<pallas_src>
import functools
import math

import jax
import jax.numpy as jnp
from jax.experimental import pallas as pl
from jax.experimental.pallas import tpu as pltpu


def _round_up(x, m):
    return (x + m - 1) // m * m


# -----------------------------------------------------------------------------
# Kernel: single invocation, all layers resident, one MXU contraction per layer
# -----------------------------------------------------------------------------
def _stacked_gru_kernel(x0_ref, h_ref, w_ref, h_out_ref, xh_scr,
                        *, num_layers, hidden_size, x_width):
    """Shapes seen by the kernel:

      x0_ref   : (B, Kt)     bf16  [x | <h slot> | 1 | 0-pad]
      h_ref    : (L, B, H)   f32   previous hidden states
      w_ref    : (L, Kt, Gt) bf16  fused weights, columns [r | z | n_x | n_h | 0-pad]
      h_out_ref: (L, B, H)   f32   new hidden states
      xh_scr   : (B, Kt)     bf16  running [x | h | 1] activation (VMEM scratch)
    """
    H = hidden_size
    Xw = x_width

    xh_scr[...] = x0_ref[...]

    # L is a small static constant -> fully unrolled straight-line code.
    for l in range(num_layers):
        h_prev = h_ref[l]                                   # (B, H) f32
        xh_scr[:, Xw:Xw + H] = h_prev.astype(jnp.bfloat16)

        # One MXU contraction per layer: [x | h | 1] @ [W_ih ; W_hh ; biases].
        g = jnp.dot(xh_scr[...], w_ref[l],
                    preferred_element_type=jnp.float32)     # (B, Gt) f32

        rz = jax.nn.sigmoid(g[:, 0:2 * H])                  # biases pre-folded
        r = rz[:, 0:H]
        z = rz[:, H:2 * H]
        n = jnp.tanh(g[:, 2 * H:3 * H] + r * g[:, 3 * H:4 * H])
        h_new = n + z * (h_prev - n)                        # == (1-z)*n + z*h

        h_out_ref[l] = h_new.astype(h_out_ref.dtype)
        if l + 1 < num_layers:
            # Inter-layer dropout is identity at eval time.  Stale x columns
            # beyond H (if input_size > H) only ever hit zero weight rows.
            xh_scr[:, 0:H] = h_new.astype(jnp.bfloat16)


# -----------------------------------------------------------------------------
# Parameter handling
# -----------------------------------------------------------------------------
def init_raw_params(key, input_size, hidden_size, num_layers):
    """torch.nn.GRUCell layout: per layer (W_ih (3H,in), W_hh (3H,H), b_ih (3H,),
    b_hh (3H,)), init U(-1/sqrt(H), 1/sqrt(H)), gate order [r, z, n]."""
    params = []
    k = 1.0 / math.sqrt(hidden_size)
    in_sz = input_size
    for _ in range(num_layers):
        key, k1, k2, k3, k4 = jax.random.split(key, 5)
        w_ih = jax.random.uniform(k1, (3 * hidden_size, in_sz), jnp.float32, -k, k)
        w_hh = jax.random.uniform(k2, (3 * hidden_size, hidden_size), jnp.float32, -k, k)
        b_ih = jax.random.uniform(k3, (3 * hidden_size,), jnp.float32, -k, k)
        b_hh = jax.random.uniform(k4, (3 * hidden_size,), jnp.float32, -k, k)
        params.append((w_ih, w_hh, b_ih, b_hh))
        in_sz = hidden_size
    return params


def prepare_stacked_params(raw_params, input_size, hidden_size,
                           weight_dtype=jnp.bfloat16):
    """Build one fused, stacked weight (L, Kt, Gt) for the kernel.

    K-row layout:        [ x (Xw) | h (H) | bias row (1) | 0-pad ]
    Gate-column layout:  [ r (H) | z (H) | n_x (H) | n_h (H) | 0-pad ]

    r/z columns stack W_i?^T over W_h?^T so one contraction yields gi+gh; the
    n gate keeps x- and h-parts separate (r multiplies the h-part only).
    All four biases are folded into the constant-1 K row.  Gates are packed
    contiguously (no per-gate 128 padding) so small H does not inflate weight
    bytes; only the totals are padded (Gt to 128 lanes, Kt to 16 rows).
    """
    L = len(raw_params)
    H = hidden_size
    Xw = max(input_size, H)               # shared x-section width across layers
    Kt = _round_up(Xw + H + 1, 16)        # contraction length (bf16-friendly)
    Gt = _round_up(4 * H, 128)            # lane-padded gate width

    w_list = []
    in_sz = input_size
    for (w_ih, w_hh, b_ih, b_hh) in raw_params:
        wi_t = w_ih.T                     # (in_sz, 3H) columns [r|z|n]
        wh_t = w_hh.T                     # (H, 3H)
        w = jnp.zeros((Kt, Gt), jnp.float32)
        # x rows: r, z, n_x
        w = w.at[:in_sz, 0:3 * H].set(wi_t)
        # h rows: r, z
        w = w.at[Xw:Xw + H, 0:2 * H].set(wh_t[:, 0:2 * H])
        # h rows: n_h
        w = w.at[Xw:Xw + H, 3 * H:4 * H].set(wh_t[:, 2 * H:3 * H])
        # bias row (multiplied by the constant-1 activation column)
        b_row = jnp.concatenate([
            b_ih[0:2 * H] + b_hh[0:2 * H],      # r, z (pre-folded)
            b_ih[2 * H:3 * H],                  # n_x
            b_hh[2 * H:3 * H],                  # n_h
        ])
        w = w.at[Xw + H, 0:4 * H].set(b_row)
        w_list.append(w.astype(weight_dtype))
        in_sz = H

    return {
        "w": jnp.stack(w_list),            # (L, Kt, Gt)
        "hidden_size": H,
        "input_size": input_size,
        "num_layers": L,
        "x_width": Xw,
        "k_total": Kt,
        "gate_width": Gt,
    }


# -----------------------------------------------------------------------------
# Forward wrapper (single fused pallas_call, one grid point)
# -----------------------------------------------------------------------------
def stacked_gru_forward(params, inp, hidden):
    """inp: (B, input_size); hidden: (L, B, hidden_size).
    Returns (output (B, H), h_1 (L, B, H)) like StackedGRU.forward (eval mode)."""
    B = inp.shape[0]
    L = params["num_layers"]
    H = params["hidden_size"]
    Xw = params["x_width"]
    Kt = params["k_total"]
    Gt = params["gate_width"]
    w = params["w"]

    # Resident-weight fast path; see TODO at top of file for the tiled path.
    assert w.size * w.dtype.itemsize < 8 * (1 << 20), "stacked weight too large for resident path"

    # [x | <h slot> | 1 | 0-pad]; the h slot is (re)filled in-kernel per layer.
    x0 = jnp.zeros((B, Kt), jnp.float32)
    x0 = x0.at[:, :inp.shape[1]].set(inp)
    x0 = x0.at[:, Xw + H].set(1.0)
    x0 = x0.astype(jnp.bfloat16)

    hidden = hidden.astype(jnp.float32)

    kernel = functools.partial(_stacked_gru_kernel,
                               num_layers=L, hidden_size=H, x_width=Xw)

    h_1 = pl.pallas_call(
        kernel,
        out_shape=jax.ShapeDtypeStruct((L, B, H), jnp.float32),
        grid_spec=pltpu.PrefetchScalarGridSpec(
            num_scalar_prefetch=0,
            grid=(1,),
            in_specs=[
                pl.BlockSpec((B, Kt), lambda i: (0, 0)),          # x0 / bias col
                pl.BlockSpec((L, B, H), lambda i: (0, 0, 0)),     # hidden
                pl.BlockSpec((L, Kt, Gt), lambda i: (0, 0, 0)),   # fused weights
            ],
            out_specs=pl.BlockSpec((L, B, H), lambda i: (0, 0, 0)),
            scratch_shapes=[pltpu.VMEM((B, Kt), jnp.bfloat16)],
        ),
        compiler_params=pltpu.CompilerParams(
            dimension_semantics=("arbitrary",),
        ),
    )(x0, hidden, w)

    # No dropout after the last layer in the reference module -> output == h_1[-1].
    return h_1[-1], h_1


# -----------------------------------------------------------------------------
# Pure-JAX f32 reference (torch.nn.GRUCell semantics) for validation
# -----------------------------------------------------------------------------
def stacked_gru_reference(raw_params, inp, hidden):
    H = hidden.shape[-1]
    x = inp
    h_1 = []
    for i, (w_ih, w_hh, b_ih, b_hh) in enumerate(raw_params):
        gi = x @ w_ih.T + b_ih
        gh = hidden[i] @ w_hh.T + b_hh
        r = jax.nn.sigmoid(gi[:, :H] + gh[:, :H])
        z = jax.nn.sigmoid(gi[:, H:2 * H] + gh[:, H:2 * H])
        n = jnp.tanh(gi[:, 2 * H:] + r * gh[:, 2 * H:])
        h_new = (1.0 - z) * n + z * hidden[i]
        x = h_new
        h_1.append(h_new)
    return x, jnp.stack(h_1)


if __name__ == "__main__":
    # Small, module-consistent shapes.
    batch = 8
    input_size = 32
    hidden_size = 32
    num_layers = 2
    dropout = 0.1  # identity at eval time

    key = jax.random.PRNGKey(0)
    key, k_in, k_hid, k_par = jax.random.split(key, 4)

    x = jax.random.normal(k_in, (batch, input_size), jnp.float32)
    hidden = jax.random.normal(k_hid, (num_layers, batch, hidden_size), jnp.float32)

    raw_params = init_raw_params(k_par, input_size, hidden_size, num_layers)
    params = prepare_stacked_params(raw_params, input_size, hidden_size)

    out, h_1 = stacked_gru_forward(params, x, hidden)
    jax.block_until_ready((out, h_1))

    assert out.shape == (batch, hidden_size)
    assert h_1.shape == (num_layers, batch, hidden_size)

    # Validate against the f32 reference (bf16 weights/activations -> loose tol).
    out_ref, h1_ref = stacked_gru_reference(raw_params, x, hidden)
    max_err = float(jnp.max(jnp.abs(h_1 - h1_ref)))
    assert max_err < 3e-2, f"max abs error {max_err}"
    assert float(jnp.max(jnp.abs(out - out_ref))) < 3e-2

    print("KERNEL_OK")
</pallas_src>

<mosaic_0001>
module attributes {stable_mosaic.version = 11 : i64} {
  func.func @_stacked_gru_kernel(%arg0: i32, %arg1: memref<8x80xbf16, #tpu.memory_space<vmem>>, %arg2: memref<2x8x32xf32, #tpu.memory_space<vmem>>, %arg3: memref<2x80x128xbf16, #tpu.memory_space<vmem>>, %arg4: memref<2x8x32xf32, #tpu.memory_space<vmem>>, %arg5: memref<8x80xbf16, #tpu.memory_space<vmem>>) attributes {dimension_semantics = [#tpu.dimension_semantics<arbitrary>], iteration_bounds = array<i64: 1>, scalar_prefetch = 0 : i64, scratch_operands = 1 : i64, tpu.core_type = #tpu.core_type<tc>, window_params = [{pipeline_mode = #tpu.pipeline_mode<synchronous>, transform_indices = @transform_0, window_bounds = array<i64: 8, 80>}, {pipeline_mode = #tpu.pipeline_mode<synchronous>, transform_indices = @transform_1, window_bounds = array<i64: 2, 8, 32>}, {pipeline_mode = #tpu.pipeline_mode<synchronous>, transform_indices = @transform_2, window_bounds = array<i64: 2, 80, 128>}, {pipeline_mode = #tpu.pipeline_mode<synchronous>, transform_indices = @transform_3, window_bounds = array<i64: 2, 8, 32>}]} {
    %c0 = arith.constant 0 : index
    %c0_0 = arith.constant 0 : index
    %0 = vector.load %arg1[%c0, %c0_0] : memref<8x80xbf16, #tpu.memory_space<vmem>>, vector<8x80xbf16>
    %c0_1 = arith.constant 0 : index
    %c0_2 = arith.constant 0 : index
    %1 = vector.load %arg5[%c0_1, %c0_2] : memref<8x80xbf16, #tpu.memory_space<vmem>>, vector<8x80xbf16>
    tpu.vector_store %arg5[%c0_1, %c0_2], %0 {strides = array<i32>} : memref<8x80xbf16, #tpu.memory_space<vmem>>, vector<8x80xbf16>,
    %c0_3 = arith.constant 0 : index
    %c0_4 = arith.constant 0 : index
    %c0_5 = arith.constant 0 : index
    %2 = vector.load %arg2[%c0_3, %c0_4, %c0_5] : memref<2x8x32xf32, #tpu.memory_space<vmem>>, vector<1x8x32xf32>
    %3 = vector.shape_cast %2 : vector<1x8x32xf32> to vector<8x32xf32>
    %4 = arith.truncf %3 : vector<8x32xf32> to vector<8x32xbf16>
    %c0_6 = arith.constant 0 : index
    %c32 = arith.constant 32 : index
    %5 = vector.load %arg5[%c0_6, %c32] : memref<8x80xbf16, #tpu.memory_space<vmem>>, vector<8x32xbf16>
    tpu.vector_store %arg5[%c0_6, %c32], %4 {strides = array<i32>} : memref<8x80xbf16, #tpu.memory_space<vmem>>, vector<8x32xbf16>,
    %c0_7 = arith.constant 0 : index
    %c0_8 = arith.constant 0 : index
    %6 = vector.load %arg5[%c0_7, %c0_8] : memref<8x80xbf16, #tpu.memory_space<vmem>>, vector<8x80xbf16>
    %c0_9 = arith.constant 0 : index
    %c0_10 = arith.constant 0 : index
    %c0_11 = arith.constant 0 : index
    %7 = vector.load %arg3[%c0_9, %c0_10, %c0_11] : memref<2x80x128xbf16, #tpu.memory_space<vmem>>, vector<1x80x128xbf16>
    %8 = vector.shape_cast %7 : vector<1x80x128xbf16> to vector<80x128xbf16>
    %cst = arith.constant dense<0.000000e+00> : vector<8x128xf32>
    %9 = tpu.matmul %6, %8, %cst {dimension_numbers = #tpu.dot_dimension_numbers<[1], [0], [0], [1], [0, 0, 1, 1], [], []>} : vector<8x80xbf16>, vector<80x128xbf16>, vector<8x128xf32> -> vector<8x128xf32>
    %10 = vector.extract_strided_slice %9 {offsets = [0, 0], sizes = [8, 64], strides = [1, 1]} : vector<8x128xf32> to vector<8x64xf32>
    %11 = arith.negf %10 : vector<8x64xf32>
    %12 = math.exp %11 : vector<8x64xf32>
    %cst_12 = arith.constant 1.000000e+00 : f32
    %13 = vector.broadcast %cst_12 : f32 to vector<8x64xf32>
    %14 = arith.addf %13, %12 : vector<8x64xf32>
    %15 = arith.divf %13, %14 : vector<8x64xf32>
    %16 = vector.extract_strided_slice %15 {offsets = [0, 0], sizes = [8, 32], strides = [1, 1]} : vector<8x64xf32> to vector<8x32xf32>
    %17 = vector.extract_strided_slice %15 {offsets = [0, 32], sizes = [8, 32], strides = [1, 1]} : vector<8x64xf32> to vector<8x32xf32>
    %18 = vector.extract_strided_slice %9 {offsets = [0, 64], sizes = [8, 32], strides = [1, 1]} : vector<8x128xf32> to vector<8x32xf32>
    %19 = vector.extract_strided_slice %9 {offsets = [0, 96], sizes = [8, 32], strides = [1, 1]} : vector<8x128xf32> to vector<8x32xf32>
    %20 = arith.mulf %16, %19 : vector<8x32xf32>
    %21 = arith.addf %18, %20 : vector<8x32xf32>
    %22 = math.tanh %21 : vector<8x32xf32>
    %23 = arith.subf %3, %22 : vector<8x32xf32>
    %24 = arith.mulf %17, %23 : vector<8x32xf32>
    %25 = arith.addf %22, %24 : vector<8x32xf32>
    %c0_13 = arith.constant 0 : index
    %c0_14 = arith.constant 0 : index
    %c0_15 = arith.constant 0 : index
    %26 = vector.load %arg4[%c0_13, %c0_14, %c0_15] : memref<2x8x32xf32, #tpu.memory_space<vmem>>, vector<1x8x32xf32>
    %27 = vector.shape_cast %26 : vector<1x8x32xf32> to vector<8x32xf32>
    %28 = vector.shape_cast %25 : vector<8x32xf32> to vector<1x8x32xf32>
    tpu.vector_store %arg4[%c0_13, %c0_14, %c0_15], %28 {strides = array<i32>} : memref<2x8x32xf32, #tpu.memory_space<vmem>>, vector<1x8x32xf32>,
    %29 = arith.truncf %25 : vector<8x32xf32> to vector<8x32xbf16>
    %c0_16 = arith.constant 0 : index
    %c0_17 = arith.constant 0 : index
    %30 = vector.load %arg5[%c0_16, %c0_17] : memref<8x80xbf16, #tpu.memory_space<vmem>>, vector<8x32xbf16>
    tpu.vector_store %arg5[%c0_16, %c0_17], %29 {strides = array<i32>} : memref<8x80xbf16, #tpu.memory_space<vmem>>, vector<8x32xbf16>,
    %c1 = arith.constant 1 : index
    %c0_18 = arith.constant 0 : index
    %c0_19 = arith.constant 0 : index
    %31 = vector.load %arg2[%c1, %c0_18, %c0_19] : memref<2x8x32xf32, #tpu.memory_space<vmem>>, vector<1x8x32xf32>
    %32 = vector.shape_cast %31 : vector<1x8x32xf32> to vector<8x32xf32>
    %33 = arith.truncf %32 : vector<8x32xf32> to vector<8x32xbf16>
    %c0_20 = arith.constant 0 : index
    %c32_21 = arith.constant 32 : index
    %34 = vector.load %arg5[%c0_20, %c32_21] : memref<8x80xbf16, #tpu.memory_space<vmem>>, vector<8x32xbf16>
    tpu.vector_store %arg5[%c0_20, %c32_21], %33 {strides = array<i32>} : memref<8x80xbf16, #tpu.memory_space<vmem>>, vector<8x32xbf16>,
    %c0_22 = arith.constant 0 : index
    %c0_23 = arith.constant 0 : index
    %35 = vector.load %arg5[%c0_22, %c0_23] : memref<8x80xbf16, #tpu.memory_space<vmem>>, vector<8x80xbf16>
    %c1_24 = arith.constant 1 : index
    %c0_25 = arith.constant 0 : index
    %c0_26 = arith.constant 0 : index
    %36 = vector.load %arg3[%c1_24, %c0_25, %c0_26] : memref<2x80x128xbf16, #tpu.memory_space<vmem>>, vector<1x80x128xbf16>
    %37 = vector.shape_cast %36 : vector<1x80x128xbf16> to vector<80x128xbf16>
    %cst_27 = arith.constant dense<0.000000e+00> : vector<8x128xf32>
    %38 = tpu.matmul %35, %37, %cst_27 {dimension_numbers = #tpu.dot_dimension_numbers<[1], [0], [0], [1], [0, 0, 1, 1], [], []>} : vector<8x80xbf16>, vector<80x128xbf16>, vector<8x128xf32> -> vector<8x128xf32>
    %39 = vector.extract_strided_slice %38 {offsets = [0, 0], sizes = [8, 64], strides = [1, 1]} : vector<8x128xf32> to vector<8x64xf32>
    %40 = arith.negf %39 : vector<8x64xf32>
    %41 = math.exp %40 : vector<8x64xf32>
    %cst_28 = arith.constant 1.000000e+00 : f32
    %42 = vector.broadcast %cst_28 : f32 to vector<8x64xf32>
    %43 = arith.addf %42, %41 : vector<8x64xf32>
    %44 = arith.divf %42, %43 : vector<8x64xf32>
    %45 = vector.extract_strided_slice %44 {offsets = [0, 0], sizes = [8, 32], strides = [1, 1]} : vector<8x64xf32> to vector<8x32xf32>
    %46 = vector.extract_strided_slice %44 {offsets = [0, 32], sizes = [8, 32], strides = [1, 1]} : vector<8x64xf32> to vector<8x32xf32>
    %47 = vector.extract_strided_slice %38 {offsets = [0, 64], sizes = [8, 32], strides = [1, 1]} : vector<8x128xf32> to vector<8x32xf32>
    %48 = vector.extract_strided_slice %38 {offsets = [0, 96], sizes = [8, 32], strides = [1, 1]} : vector<8x128xf32> to vector<8x32xf32>
    %49 = arith.mulf %45, %48 : vector<8x32xf32>
    %50 = arith.addf %47, %49 : vector<8x32xf32>
    %51 = math.tanh %50 : vector<8x32xf32>
    %52 = arith.subf %32, %51 : vector<8x32xf32>
    %53 = arith.mulf %46, %52 : vector<8x32xf32>
    %54 = arith.addf %51, %53 : vector<8x32xf32>
    %c1_29 = arith.constant 1 : index
    %c0_30 = arith.constant 0 : index
    %c0_31 = arith.constant 0 : index
    %55 = vector.load %arg4[%c1_29, %c0_30, %c0_31] : memref<2x8x32xf32, #tpu.memory_space<vmem>>, vector<1x8x32xf32>
    %56 = vector.shape_cast %55 : vector<1x8x32xf32> to vector<8x32xf32>
    %57 = vector.shape_cast %54 : vector<8x32xf32> to vector<1x8x32xf32>
    tpu.vector_store %arg4[%c1_29, %c0_30, %c0_31], %57 {strides = array<i32>} : memref<2x8x32xf32, #tpu.memory_space<vmem>>, vector<1x8x32xf32>,
    return
  }
  func.func @transform_0(%arg0: i32) -> (i32, i32) {
    %c0_i32 = arith.constant 0 : i32
    %c0_i32_0 = arith.constant 0 : i32
    %c0_i32_1 = arith.constant 0 : i32
    return %c0_i32, %c0_i32_0 : i32, i32
  }
  func.func @transform_1(%arg0: i32) -> (i32, i32, i32) {
    %c0_i32 = arith.constant 0 : i32
    %c0_i32_0 = arith.constant 0 : i32
    %c0_i32_1 = arith.constant 0 : i32
    %c0_i32_2 = arith.constant 0 : i32
    return %c0_i32, %c0_i32_0, %c0_i32_1 : i32, i32, i32
  }
  func.func @transform_2(%arg0: i32) -> (i32, i32, i32) {
    %c0_i32 = arith.constant 0 : i32
    %c0_i32_0 = arith.constant 0 : i32
    %c0_i32_1 = arith.constant 0 : i32
    %c0_i32_2 = arith.constant 0 : i32
    return %c0_i32, %c0_i32_0, %c0_i32_1 : i32, i32, i32
  }
  func.func @transform_3(%arg0: i32) -> (i32, i32, i32) {
    %c0_i32 = arith.constant 0 : i32
    %c0_i32_0 = arith.constant 0 : i32
    %c0_i32_1 = arith.constant 0 : i32
    %c0_i32_2 = arith.constant 0 : i32
    return %c0_i32, %c0_i32_0, %c0_i32_1 : i32, i32, i32
  }
}

</mosaic_0001>

<llo_original>
// kernel: tpu_custom_call.1
$region0: #{tpu_custom_call.1}
  #allocation0 [shape = 'u32[]', space=smem, size = 0x4, offset = 0x4, fixed_abs, tag = 'smem constant byte address 0x4 - core index']
  #allocation1 [shape = 'u32[144,128]{1,0:T(1,128)}', space=vmem, size = 0x12000, scoped, tag = 'internal scratch']
  #allocation2 [shape = 'bf16[8,80]{1,0:T(8,128)(2,1)}', space=vmem, size = 0x800, scoped, tag = 'scratch operand']
  %s0 = inlined_call_operand.hbm [shape: bf16[8,80], index: 0, kind: input, shape index: {}]
  %s1 = inlined_call_operand.hbm [shape: f32[2,8,32], index: 1, kind: input, shape index: {}]
  %s2 = inlined_call_operand.hbm [shape: bf16[2,80,128], index: 2, kind: input, shape index: {}]
  %s3 = inlined_call_operand.hbm [shape: f32[2,8,32], index: 3, kind: output, shape index: {}]
  %s4 = sld [smem:[#allocation0]]
  $region34: #{tpu_custom_call.1} parent=0
    _
  %s6 = ssub.s32 1, %s4
  %s7 = scalar_select 0, %s6, %s4
  $region1: #{tpu_custom_call.1} parent=0
    #allocation3 [shape = 'u8[2048]{0}', space=vmem, size = 0x800, scoped, tag = 'input window, operand 0, single buffered']
    #allocation4 [shape = 's32[1]{0}', space=sflag, size = 0x4, scoped, tag = 'scoped memory for tpu_custom_call.1']
    #allocation5 [shape = 's32[1]{0}', space=sflag, size = 0x4, scoped, tag = 'scoped memory for tpu_custom_call.1']
    #allocation6 [shape = 'u8[8192]{0}', space=vmem, size = 0x2000, scoped, tag = 'input window, operand 1, single buffered']
    #allocation7 [shape = 's32[1]{0}', space=sflag, size = 0x4, scoped, tag = 'scoped memory for tpu_custom_call.1']
    #allocation8 [shape = 'u8[40960]{0}', space=vmem, size = 0xa000, scoped, tag = 'input window, operand 2, single buffered']
    #allocation9 [shape = 'u8[8192]{0}', space=vmem, size = 0x2000, scoped, tag = 'output window, operand 0, single buffered']
    %8 = vsyncpa [#allocation4], 0
    %9 = vsyncpa [#allocation7], 0
    %10 = vsyncpa [#allocation5], 0
    // Predicated region
    $region2: #{tpu_custom_call.1} parent=1 // pred_check
      _
    $region3: #{tpu_custom_call.1} parent=1 // pred_check_branch
      %12 = sbr.rel (0) target = $region5
    $region4: #{tpu_custom_call.1} parent=1 // pred_region
      %s14 = ssub.s32 64, 64
      %15 = vsyncadd [#allocation4], %s14
      %s17 = sshll.u32 [#allocation3], 4
      %s18 = int_to_ptr.vmem [resolvable:$true] %s17
      %20 = dma.hbm_to_vmem [thread:$0]  %s0, 64, %s18, [#allocation4]
    $region5: #{tpu_custom_call.1} parent=1 // pred_fallthru
      _
    // Predicated region
    $region6: #{tpu_custom_call.1} parent=1 // pred_check
      _
    $region7: #{tpu_custom_call.1} parent=1 // pred_check_branch
      %22 = sbr.rel (0) target = $region9
    $region8: #{tpu_custom_call.1} parent=1 // pred_region
      %s24 = ssub.s32 256, 256
      %25 = vsyncadd [#allocation7], %s24
      %s26 = sshll.u32 [#allocation6], 4
      %s27 = int_to_ptr.vmem [resolvable:$true] %s26
      %32 = dma.hbm_to_vmem [thread:$0]  %s1, 256, %s27, [#allocation7], 128, 128, 8
    $region9: #{tpu_custom_call.1} parent=1 // pred_fallthru
      _
    // Predicated region
    $region10: #{tpu_custom_call.1} parent=1 // pred_check
      _
    $region11: #{tpu_custom_call.1} parent=1 // pred_check_branch
      %34 = sbr.rel (0) target = $region13
    $region12: #{tpu_custom_call.1} parent=1 // pred_region
      %s36 = ssub.s32 1280, 1280
      %37 = vsyncadd [#allocation7], %s36
      %s38 = sshll.u32 [#allocation8], 4
      %s39 = int_to_ptr.vmem [resolvable:$true] %s38
      %44 = dma.hbm_to_vmem [thread:$0]  %s2, 1280, %s39, [#allocation7], 64, 64, 4
    $region13: #{tpu_custom_call.1} parent=1 // pred_fallthru
      _
    // Predicated region
    $region14: #{tpu_custom_call.1} parent=1 // pred_check
      _
    $region15: #{tpu_custom_call.1} parent=1 // pred_check_branch
      %46 = sbr.rel (0) target = $region17
    $region16: #{tpu_custom_call.1} parent=1 // pred_region
      %47 = dma.done [#allocation4], 64
    $region17: #{tpu_custom_call.1} parent=1 // pred_fallthru
      _
    // Predicated region
    $region18: #{tpu_custom_call.1} parent=1 // pred_check
      _
    $region19: #{tpu_custom_call.1} parent=1 // pred_check_branch
      %49 = sbr.rel (0) target = $region21
    $region20: #{tpu_custom_call.1} parent=1 // pred_region
      %50 = dma.done [#allocation7], 256
    $region21: #{tpu_custom_call.1} parent=1 // pred_fallthru
      _
    // Predicated region
    $region22: #{tpu_custom_call.1} parent=1 // pred_check
      _
    $region23: #{tpu_custom_call.1} parent=1 // pred_check_branch
      %52 = sbr.rel (0) target = $region25
    $region24: #{tpu_custom_call.1} parent=1 // pred_region
      %53 = dma.done [#allocation7], 1280
    $region25: #{tpu_custom_call.1} parent=1 // pred_fallthru
      _
    %v55 = vld [vmem:[#allocation3] sm:$0xf]
    %vm56 = vcmask 650240
    %57 = vst.msk [vmem:[#allocation2] sm:$0xf] %vm56, %v55
    %v58 = vld [vmem:[#allocation6] sm:$0xff]
    %v59 = vpack.c.bf16 %v58, %v58
    %v61 = vunpack.c.l.b16 %v59
    %v62 = vpack.c.b16 %v61, %v61
    %63 = vrot.lane.b32.xlu0 %v62, 32
    %v64 = vpop.permute.xlu0 %63
    %vm66 = vcmask 519424
    %67 = vst.msk [vmem:[#allocation2] sm:$0xf] %vm66, %v64
    %v68 = vld [vmem:[#allocation2] sm:$0xf]
    %v69 = vld [vmem:[#allocation8] sm:$0xf]
    %v70 = vld [vmem:[#allocation8 + $0x4] sm:$0xf]
    %v71 = vld [vmem:[#allocation8 + $0x8] sm:$0xf]
    %v72 = vld [vmem:[#allocation8 + $0xc] sm:$0xf]
    %v73 = vld [vmem:[#allocation8 + $0x10] sm:$0xf]
    %v74 = vld [vmem:[#allocation8 + $0x14] sm:$0xf]
    %v75 = vld [vmem:[#allocation8 + $0x18] sm:$0xf]
    %v76 = vld [vmem:[#allocation8 + $0x1c] sm:$0xf]
    %v77 = vld [vmem:[#allocation8 + $0x20] sm:$0xf]
    %v78 = vld [vmem:[#allocation8 + $0x24] sm:$0xf]
    %v89 = vunpack.c.l.b16 %v69
    %v90 = vunpack.c.l.b16 %v70
    %v91 = vunpack.c.l.b16 %v71
    %v92 = vunpack.c.l.b16 %v72
    %v93 = vunpack.c.l.b16 %v73
    %v94 = vunpack.c.l.b16 %v74
    %v95 = vunpack.c.l.b16 %v75
    %v96 = vunpack.c.l.b16 %v76
    %v97 = vunpack.c.l.b16 %v77
    %v98 = vunpack.c.l.b16 %v78
    %v99 = vpack.c.b16 %v90, %v89
    %v100 = vpack.c.b16 %v92, %v91
    %v101 = vpack.c.b16 %v94, %v93
    %v102 = vpack.c.b16 %v96, %v95
    %v103 = vpack.c.b16 %v98, %v97
    %vm109 = vcmask 654336
    %v111 = vsel %vm109, %v68, 0
    %113 = vmatprep.subr.bf16.mxu0 0
    %114 = vmatpush1.bf16.msra.mxu0 %v99
    %115 = vmatprep.subr.bf16.mxu0 0
    %116 = vmatpush1.bf16.msra.mxu0 %v100
    %117 = vmatprep.subr.bf16.mxu0 0
    %118 = vmatpush1.bf16.msra.mxu0 %v101
    %119 = vmatprep.subr.bf16.mxu0 0
    %120 = vmatpush1.bf16.msra.mxu0 %v102
    %121 = vmatprep.subr.bf16.mxu0 0
    %122 = vmatpush1.bf16.msra.mxu0 %v103
    %123 = vmatprep.subr.bf16.mxu0 0
    %124 = vmatpush1.bf16.msra.mxu0 0
    %125 = vmatprep.subr.bf16.mxu0 0
    %126 = vmatpush1.bf16.msra.mxu0 0
    %127 = vmatprep.subr.bf16.mxu0 0
    %128 = vmatpush1.bf16.msra.mxu0 0
    %129 = vmatprep.subr.bf16.mxu0 0
    %130 = vmatpush1.bf16.msra.mxu0 0
    %131 = vmatprep.subr.bf16.mxu0 0
    %132 = vmatpush1.bf16.msra.mxu0 0
    %133 = vmatprep.subr.bf16.mxu0 0
    %134 = vmatpush1.bf16.msra.mxu0 0
    %135 = vmatprep.subr.bf16.mxu0 0
    %136 = vmatpush1.bf16.msra.mxu0 0
    %137 = vmatprep.subr.bf16.mxu0 0
    %138 = vmatpush1.bf16.msra.mxu0 0
    %139 = vmatprep.subr.bf16.mxu0 0
    %140 = vmatpush1.bf16.msra.mxu0 0
    %141 = vmatprep.subr.bf16.mxu0 0
    %142 = vmatpush1.bf16.msra.mxu0 0
    %143 = vmatprep.subr.bf16.mxu0 0
    %144 = vmatpush1.bf16.msra.mxu0 0
    %145 = vmatprep.mubr.bf16.mxu0 0
    %146 = vmatmul.mubr.bf16.gmra.mrb[0].mxu0 %v111
    %v147 = vpop.f32.mrb[0].mxu0
    %v148 = vadd.f32 0.0, %v147
    %v149 = vpop.f32.mrb[0].mxu0
    %v150 = vpop.f32.mrb[0].mxu0
    %v151 = vpop.f32.mrb[0].mxu0
    %152 = vdwg.mxu0
    %v153 = vxor.u32 %v148, 2147483648
    %v154 = vmul.f32 %v153, 1.442695
    %v155 = vpow.pop %v154
    %v156 = vadd.f32 %v155, 1.0
    %v157 = vrcp.pop %v156
    %v158 = vmul.f32 1.0, %v157
    %160 = vrot.lane.b32.xlu0 %v148, 32
    %v161 = vpop.permute.xlu0 %160
    %v163 = vmul.f32 %v158, %v161
    %165 = vrot.lane.b32.xlu0 %v163, 64
    %v166 = vpop.permute.xlu0 %165
    %v168 = vadd.f32 %v148, %v166
    %v169 = vtanh.pop %v168
    %171 = vrot.lane.b32.xlu0 %v169, 64
    %v172 = vpop.permute.xlu0 %171
    %v174 = vsub.f32 %v58, %v172
    %176 = vrot.lane.b32.xlu0 %v174, 32
    %v177 = vpop.permute.xlu0 %176
    %v179 = vmul.f32 %v158, %v177
    %181 = vrot.lane.b32.xlu0 %v179, 32
    %v182 = vpop.permute.xlu0 %181
    %v184 = vadd.f32 %v169, %v182
    %186 = vrot.lane.b32.xlu0 %v184, 64
    %v187 = vpop.permute.xlu0 %186
    %vm189 = vcmask 261120
    %190 = vst.msk [vmem:[#allocation9] sm:$0xff] %vm189, %v187
    %v191 = vpack.c.bf16 %v184, %v184
    %v193 = vunpack.c.l.b16 %v191
    %v194 = vpack.c.b16 %v193, %v193
    %195 = vrot.lane.b32.xlu0 %v194, 64
    %v196 = vpop.permute.xlu0 %195
    %vm198 = vcmask 257024
    %199 = vst.msk [vmem:[#allocation2] sm:$0xf] %vm198, %v196
    %s200 = scalar_lea.vmem [#allocation6], 8
    %v201 = vld [vmem:[%s200] sm:$0xff]
    %v202 = vpack.c.bf16 %v201, %v201
    %v204 = vunpack.c.l.b16 %v202
    %v205 = vpack.c.b16 %v204, %v204
    %206 = vrot.lane.b32.xlu0 %v205, 32
    %v207 = vpop.permute.xlu0 %206
    %209 = vst.msk [vmem:[#allocation2] sm:$0xf] %vm66, %v207
    %v210 = vld [vmem:[#allocation2] sm:$0xf]
    %s211 = scalar_lea.vmem [#allocation8], 40
    %v212 = vld [vmem:[%s211] sm:$0xf]
    %v213 = vld [vmem:[%s211 + $0x4] sm:$0xf]
    %v214 = vld [vmem:[%s211 + $0x8] sm:$0xf]
    %v215 = vld [vmem:[%s211 + $0xc] sm:$0xf]
    %v216 = vld [vmem:[%s211 + $0x10] sm:$0xf]
    %v217 = vld [vmem:[%s211 + $0x14] sm:$0xf]
    %v218 = vld [vmem:[%s211 + $0x18] sm:$0xf]
    %v219 = vld [vmem:[%s211 + $0x1c] sm:$0xf]
    %v220 = vld [vmem:[%s211 + $0x20] sm:$0xf]
    %v221 = vld [vmem:[%s211 + $0x24] sm:$0xf]
    %v232 = vunpack.c.l.b16 %v212
    %v233 = vunpack.c.l.b16 %v213
    %v234 = vunpack.c.l.b16 %v214
    %v235 = vunpack.c.l.b16 %v215
    %v236 = vunpack.c.l.b16 %v216
    %v237 = vunpack.c.l.b16 %v217
    %v238 = vunpack.c.l.b16 %v218
    %v239 = vunpack.c.l.b16 %v219
    %v240 = vunpack.c.l.b16 %v220
    %v241 = vunpack.c.l.b16 %v221
    %v242 = vpack.c.b16 %v233, %v232
    %v243 = vpack.c.b16 %v235, %v234
    %v244 = vpack.c.b16 %v237, %v236
    %v245 = vpack.c.b16 %v239, %v238
    %v246 = vpack.c.b16 %v241, %v240
    %v253 = vsel %vm109, %v210, 0
    %255 = vmatprep.subr.bf16.mxu0 0
    %256 = vmatpush1.bf16.msra.mxu0 %v242
    %257 = vmatprep.subr.bf16.mxu0 0
    %258 = vmatpush1.bf16.msra.mxu0 %v243
    %259 = vmatprep.subr.bf16.mxu0 0
    %260 = vmatpush1.bf16.msra.mxu0 %v244
    %261 = vmatprep.subr.bf16.mxu0 0
    %262 = vmatpush1.bf16.msra.mxu0 %v245
    %263 = vmatprep.subr.bf16.mxu0 0
    %264 = vmatpush1.bf16.msra.mxu0 %v246
    %265 = vmatprep.subr.bf16.mxu0 0
    %266 = vmatpush1.bf16.msra.mxu0 0
    %267 = vmatprep.subr.bf16.mxu0 0
    %268 = vmatpush1.bf16.msra.mxu0 0
    %269 = vmatprep.subr.bf16.mxu0 0
    %270 = vmatpush1.bf16.msra.mxu0 0
    %271 = vmatprep.subr.bf16.mxu0 0
    %272 = vmatpush1.bf16.msra.mxu0 0
    %273 = vmatprep.subr.bf16.mxu0 0
    %274 = vmatpush1.bf16.msra.mxu0 0
    %275 = vmatprep.subr.bf16.mxu0 0
    %276 = vmatpush1.bf16.msra.mxu0 0
    %277 = vmatprep.subr.bf16.mxu0 0
    %278 = vmatpush1.bf16.msra.mxu0 0
    %279 = vmatprep.subr.bf16.mxu0 0
    %280 = vmatpush1.bf16.msra.mxu0 0
    %281 = vmatprep.subr.bf16.mxu0 0
    %282 = vmatpush1.bf16.msra.mxu0 0
    %283 = vmatprep.subr.bf16.mxu0 0
    %284 = vmatpush1.bf16.msra.mxu0 0
    %285 = vmatprep.subr.bf16.mxu0 0
    %286 = vmatpush1.bf16.msra.mxu0 0
    %287 = vmatprep.mubr.bf16.mxu0 0
    %288 = vmatmul.mubr.bf16.gmra.mrb[0].mxu0 %v253
    %v289 = vpop.f32.mrb[0].mxu0
    %v290 = vadd.f32 0.0, %v289
    %v291 = vpop.f32.mrb[0].mxu0
    %v292 = vpop.f32.mrb[0].mxu0
    %v293 = vpop.f32.mrb[0].mxu0
    %294 = vdwg.mxu0
    %v295 = vxor.u32 %v290, 2147483648
    %v296 = vmul.f32 %v295, 1.442695
    %v297 = vpow.pop %v296
    %v298 = vadd.f32 %v297, 1.0
    %v299 = vrcp.pop %v298
    %v300 = vmul.f32 1.0, %v299
    %302 = vrot.lane.b32.xlu0 %v290, 32
    %v303 = vpop.permute.xlu0 %302
    %v305 = vmul.f32 %v300, %v303
    %307 = vrot.lane.b32.xlu0 %v305, 64
    %v308 = vpop.permute.xlu0 %307
    %v310 = vadd.f32 %v290, %v308
    %v311 = vtanh.pop %v310
    %313 = vrot.lane.b32.xlu0 %v311, 64
    %v314 = vpop.permute.xlu0 %313
    %v316 = vsub.f32 %v201, %v314
    %318 = vrot.lane.b32.xlu0 %v316, 32
    %v319 = vpop.permute.xlu0 %318
    %v321 = vmul.f32 %v300, %v319
    %323 = vrot.lane.b32.xlu0 %v321, 32
    %v324 = vpop.permute.xlu0 %323
    %v326 = vadd.f32 %v311, %v324
    %328 = vrot.lane.b32.xlu0 %v326, 64
    %v329 = vpop.permute.xlu0 %328
    %s331 = scalar_lea.vmem [#allocation9], 8
    %332 = vst.msk [vmem:[%s331] sm:$0xff] %vm189, %v329
    // Predicated region
    $region26: #{tpu_custom_call.1} parent=1 // pred_check
      _
    $region27: #{tpu_custom_call.1} parent=1 // pred_check_branch
      %334 = sbr.rel (0) target = $region29
    $region28: #{tpu_custom_call.1} parent=1 // pred_region
      %s336 = ssub.s32 256, 256
      %337 = vsyncadd [#allocation5], %s336
      %s338 = sshll.u32 [#allocation9], 4
      %s339 = int_to_ptr.vmem [resolvable:$true] %s338
      %344 = dma.vmem_to_hbm [thread:$0]  %s339, 256, %s3, [#allocation5], 128, 128, 8
    $region29: #{tpu_custom_call.1} parent=1 // pred_fallthru
      _
    // Predicated region
    $region30: #{tpu_custom_call.1} parent=1 // pred_check
      _
    $region31: #{tpu_custom_call.1} parent=1 // pred_check_branch
      %346 = sbr.rel (0) target = $region33
    $region32: #{tpu_custom_call.1} parent=1 // pred_region
      %347 = dma.done [#allocation5], 256
    $region33: #{tpu_custom_call.1} parent=1 // pred_fallthru
      _
    %348 = vsyncpa [#allocation4], 1
    %349 = vsyncpa [#allocation7], 1
    %350 = vsyncpa [#allocation5], 1

</llo_original>
